<compile_context>
chip_gen: v7x
topology: tpu7x:2x2x1
jax: 0.10.0
libtpu: 0.0.40
codegen_flags: <defaults>
</compile_context>

<pallas_src>
import functools

import jax
import jax.numpy as jnp
from jax import lax
from jax.experimental import pallas as pl
from jax.experimental.pallas import tpu as pltpu

EPS = 1e-12  # matches torch F.normalize(eps=1e-12)


def _l2_normalize(x, axis):
    # x / max(||x||, EPS)  via rsqrt-multiply (EUP) instead of sqrt + divide (VPU).
    sumsq = jnp.sum(x * x, axis=axis, keepdims=True)
    return x * lax.rsqrt(jnp.maximum(sumsq, EPS * EPS))


def _pn_head_kernel(scale_ref, ftest_ref, ftrain_ref, o_ref, proto_ref, *,
                    way, use_bf16_matmul):
    """Fused PN head for one (batch, query-tile) grid step.

    scale_ref : SMEM (1,) f32                learnable scale_cls
    ftest_ref : VMEM [1, NQ_TILE, HW, C]     query features (channels on lanes)
    ftrain_ref: VMEM [1, way*shot, HW, C]    support features, label order [abcd abcd ...]
    o_ref     : VMEM [1, NQ_TILE, W_pad]     lane-padded logits (columns >= way are zero)
    proto_ref : VMEM scratch [C, W_pad]      normalized prototypes (transposed), cached per b
    """

    def pool_norm(x):  # x: [N, HW, C] float32
        xn = _l2_normalize(x, axis=2)          # per-pixel channel normalize (lane reduce)
        pooled = jnp.sum(xn, axis=1)           # spatial avg-pool; 1/HW cancels in next normalize
        return _l2_normalize(pooled, axis=1)   # cosine normalize pooled feature -> [N, C]

    # Prototypes are a function of the support features only: compute once per batch
    # element (first query tile) and cache in VMEM scratch for the remaining tiles.
    @pl.when(pl.program_id(1) == 0)
    def _build_prototypes():
        ftr = pool_norm(ftrain_ref[0].astype(jnp.float32))        # [NS, C]
        ns = ftr.shape[0]
        w_pad = o_ref.shape[-1]
        # One-hot class matrix A[s, w] = 1 iff (s % way == w); columns >= way stay zero.
        row = lax.broadcasted_iota(jnp.int32, (ns, w_pad), 0)
        col = lax.broadcasted_iota(jnp.int32, (ns, w_pad), 1)
        onehot = (row % way == col).astype(jnp.float32)           # [NS, W_pad]
        # proto_T[c, w] = sum_s A[s, w] * ftr[s, c]   (1/shot cancels in the L2 normalize)
        proto_t = lax.dot_general(ftr, onehot, (((0,), (0,)), ((), ())),
                                  preferred_element_type=jnp.float32)   # [C, W_pad]
        proto_t = _l2_normalize(proto_t, axis=0)                  # zero columns remain zero
        proto_ref[...] = proto_t.astype(proto_ref.dtype)

    fte = pool_norm(ftest_ref[0].astype(jnp.float32))             # [NQ_TILE, C]
    lhs = fte.astype(jnp.bfloat16) if use_bf16_matmul else fte
    # Canonical [M,K] x [K,N] MXU matmul (prototype already transposed).
    scores = jnp.dot(lhs, proto_ref[...], preferred_element_type=jnp.float32)
    o_ref[0] = (scale_ref[0] * scores).astype(o_ref.dtype)


def pn_head_forward(scale_cls, features_test, features_train, way, shot, *,
                    use_bf16_matmul=True, nq_tile=64):
    """PN_head forward (metric='cosine', scale_cls learnable, normalize=True).

    scale_cls     : (1,) f32
    features_test : [B, Nq, C, H, W]
    features_train: [B, way*shot, C, H, W]   label order [abcd abcd ...]
    returns       : [B, Nq, way] logits (float32)
    """
    B, Nq, C, H, W = features_test.shape
    NS = features_train.shape[1]
    assert NS == way * shot
    HW = H * W

    # NHWC relayout so C lands on the lane axis inside the kernel.  One HBM-bound XLA
    # transpose; the kernel reads each feature exactly once, so it pays for itself.
    fte = jnp.transpose(features_test, (0, 1, 3, 4, 2)).reshape(B, Nq, HW, C)
    ftr = jnp.transpose(features_train, (0, 1, 3, 4, 2)).reshape(B, NS, HW, C)

    w_pad = max(128, pl.cdiv(way, 128) * 128)      # lane-dense output block

    # Query-tile size: full Nq for small episodes; otherwise a multiple of 8 (it is the
    # 2nd-minor dim of the output block).
    if Nq <= nq_tile:
        nq_t = Nq
    else:
        nq_t = max(8, (nq_tile // 8) * 8)
    n_q_tiles = pl.cdiv(Nq, nq_t)

    proto_dtype = jnp.bfloat16 if use_bf16_matmul else jnp.float32
    kern = functools.partial(_pn_head_kernel, way=way, use_bf16_matmul=use_bf16_matmul)

    out = pl.pallas_call(
        kern,
        out_shape=jax.ShapeDtypeStruct((B, Nq, w_pad), jnp.float32),
        grid_spec=pltpu.PrefetchScalarGridSpec(
            num_scalar_prefetch=0,
            grid=(B, n_q_tiles),
            in_specs=[
                pl.BlockSpec(memory_space=pltpu.MemorySpace.SMEM),            # scale_cls
                pl.BlockSpec((1, nq_t, HW, C), lambda b, j: (b, j, 0, 0)),    # queries
                # Same block index across j -> support features are NOT re-DMA'd per tile.
                pl.BlockSpec((1, NS, HW, C), lambda b, j: (b, 0, 0, 0)),
            ],
            out_specs=pl.BlockSpec((1, nq_t, w_pad), lambda b, j: (b, j, 0)),
            scratch_shapes=[pltpu.VMEM((C, w_pad), proto_dtype)],             # cached prototypes
        ),
        compiler_params=pltpu.CompilerParams(
            # The prototype scratch is carried across the Nq-tile axis -> "arbitrary".
            # The batch axis is "parallel" (v7x megacore splits on it; no-op on v5e/v6e).
            dimension_semantics=("parallel", "arbitrary"),
        ),
    )(scale_cls, fte, ftr)
    return out[:, :, :way]


# ---------------------------------------------------------------------------
# Pure-JAX reference (mirrors the PyTorch code) for a correctness check.
# ---------------------------------------------------------------------------
def _ref_forward(scale_cls, features_test, features_train, way, shot):
    def l2norm(x, axis):
        n = jnp.sqrt(jnp.sum(x * x, axis=axis, keepdims=True))
        return x / jnp.maximum(n, EPS)

    ftr = l2norm(features_train, axis=2)
    ftr = jnp.mean(ftr, axis=(3, 4))                 # adaptive_avg_pool2d(., 1)
    ftr = l2norm(ftr, axis=2)                        # cosine
    B = ftr.shape[0]
    proto = jnp.mean(ftr.reshape(B, shot, way, -1), axis=1)
    proto = l2norm(proto, axis=2)

    fte = l2norm(features_test, axis=2)
    fte = jnp.mean(fte, axis=(3, 4))
    fte = l2norm(fte, axis=2)
    return scale_cls[0] * jnp.einsum("bqc,bwc->bqw", fte, proto)


if __name__ == "__main__":
    # Small, deterministic few-shot episode: 5-way 2-shot, 6 queries, C=32, 4x4 feature maps.
    B, way, shot, Nq, C, H, W = 2, 5, 2, 6, 32, 4, 4

    key = jax.random.PRNGKey(0)
    k1, k2 = jax.random.split(key)
    features_test = jax.random.normal(k1, (B, Nq, C, H, W), dtype=jnp.float32)
    features_train = jax.random.normal(k2, (B, way * shot, C, H, W), dtype=jnp.float32)

    # learnable scale_cls parameter, shape (1,), initialized to 10.0 (deterministic)
    scale_cls = jnp.full((1,), 10.0, dtype=jnp.float32)

    ref = _ref_forward(scale_cls, features_test, features_train, way, shot)

    # f32 MXU path: tight tolerance vs reference.
    logits_f32 = pn_head_forward(scale_cls, features_test, features_train, way, shot,
                                 use_bf16_matmul=False)
    logits_f32 = jax.block_until_ready(logits_f32)
    assert logits_f32.shape == (B, Nq, way)
    assert jnp.allclose(logits_f32, ref, atol=1e-3, rtol=1e-3), "f32 path mismatch vs reference"

    # Default bf16 MXU path: values are post-L2-normalize (in [-1,1]); looser tolerance.
    logits_bf16 = pn_head_forward(scale_cls, features_test, features_train, way, shot)
    logits_bf16 = jax.block_until_ready(logits_bf16)
    assert logits_bf16.shape == (B, Nq, way)
    assert jnp.allclose(logits_bf16, ref, atol=5e-2, rtol=5e-2), "bf16 path mismatch vs reference"

    print("KERNEL_OK")
</pallas_src>

<mosaic_0001>
module attributes {stable_mosaic.version = 11 : i64} {
  func.func @_pn_head_kernel(%arg0: i32, %arg1: i32, %arg2: memref<1xf32, #tpu.memory_space<smem>>, %arg3: memref<1x6x16x32xf32, #tpu.memory_space<vmem>>, %arg4: memref<1x10x16x32xf32, #tpu.memory_space<vmem>>, %arg5: memref<1x6x128xf32, #tpu.memory_space<vmem>>, %arg6: memref<32x128xf32, #tpu.memory_space<vmem>>) attributes {dimension_semantics = [#tpu.dimension_semantics<parallel>, #tpu.dimension_semantics<arbitrary>], iteration_bounds = array<i64: 2, 1>, scalar_prefetch = 0 : i64, scratch_operands = 1 : i64, tpu.core_type = #tpu.core_type<tc>, window_params = [{transform_indices = @transform_0, window_bounds = array<i64: 1>}, {transform_indices = @transform_1, window_bounds = array<i64: 1, 6, 16, 32>}, {transform_indices = @transform_2, window_bounds = array<i64: 1, 10, 16, 32>}, {transform_indices = @transform_3, window_bounds = array<i64: 1, 6, 128>}]} {
    %c0_i32 = arith.constant 0 : i32
    %0 = arith.cmpi eq, %arg1, %c0_i32 : i32
    %1 = arith.extui %0 : i1 to i32
    %c0_i32_0 = arith.constant 0 : i32
    %2 = arith.cmpi ne, %1, %c0_i32_0 : i32
    scf.if %2 {
      %c0_15 = arith.constant 0 : index
      %c0_16 = arith.constant 0 : index
      %c0_17 = arith.constant 0 : index
      %c0_18 = arith.constant 0 : index
      %30 = vector.load %arg4[%c0_15, %c0_16, %c0_17, %c0_18] : memref<1x10x16x32xf32, #tpu.memory_space<vmem>>, vector<1x10x16x32xf32>
      %31 = vector.shape_cast %30 : vector<1x10x16x32xf32> to vector<10x16x32xf32>
      %32 = arith.mulf %31, %31 : vector<10x16x32xf32>
      %cst_19 = arith.constant dense<0.000000e+00> : vector<10x16xf32>
      %33 = vector.multi_reduction <add>, %32, %cst_19 [2] : vector<10x16x32xf32> to vector<10x16xf32>
      %34 = vector.shape_cast %33 : vector<10x16xf32> to vector<10x16x1xf32>
      %cst_20 = arith.constant 1.000000e-24 : f32
      %35 = vector.broadcast %cst_20 : f32 to vector<10x16x1xf32>
      %36 = arith.maximumf %34, %35 : vector<10x16x1xf32>
      %37 = math.rsqrt %36 : vector<10x16x1xf32>
      %38 = vector.broadcast %37 : vector<10x16x1xf32> to vector<10x16x32xf32>
      %39 = arith.mulf %31, %38 : vector<10x16x32xf32>
      %cst_21 = arith.constant dense<0.000000e+00> : vector<10x32xf32>
      %40 = vector.multi_reduction <add>, %39, %cst_21 [1] : vector<10x16x32xf32> to vector<10x32xf32>
      %41 = arith.mulf %40, %40 : vector<10x32xf32>
      %cst_22 = arith.constant dense<0.000000e+00> : vector<10xf32>
      %42 = vector.multi_reduction <add>, %41, %cst_22 [1] : vector<10x32xf32> to vector<10xf32>
      %43 = vector.shape_cast %42 : vector<10xf32> to vector<10x1xf32>
      %cst_23 = arith.constant 1.000000e-24 : f32
      %44 = vector.broadcast %cst_23 : f32 to vector<10x1xf32>
      %45 = arith.maximumf %43, %44 : vector<10x1xf32>
      %46 = math.rsqrt %45 : vector<10x1xf32>
      %47 = vector.broadcast %46 : vector<10x1xf32> to vector<10x32xf32>
      %48 = arith.mulf %40, %47 : vector<10x32xf32>
      %49 = tpu.iota {dimensions = array<i32: 0>} : vector<10x128xi32>
      %50 = tpu.iota {dimensions = array<i32: 1>} : vector<10x128xi32>
      %c5_i32 = arith.constant 5 : i32
      %c0_i32_24 = arith.constant 0 : i32
      %51 = arith.cmpi eq, %c5_i32, %c0_i32_24 : i32
      %c1_i32 = arith.constant 1 : i32
      %52 = arith.select %51, %c1_i32, %c5_i32 : i32
      %53 = vector.broadcast %52 : i32 to vector<10x128xi32>
      %54 = arith.remsi %49, %53 : vector<10x128xi32>
      %c0_i32_25 = arith.constant 0 : i32
      %55 = vector.broadcast %c0_i32_25 : i32 to vector<10x128xi32>
      %56 = arith.cmpi ne, %54, %55 : vector<10x128xi32>
      %c0_i32_26 = arith.constant 0 : i32
      %57 = vector.broadcast %c0_i32_26 : i32 to vector<10x128xi32>
      %58 = arith.cmpi slt, %54, %57 : vector<10x128xi32>
      %c0_i32_27 = arith.constant 0 : i32
      %59 = arith.cmpi slt, %52, %c0_i32_27 : i32
      %60 = vector.broadcast %59 : i1 to vector<10x128xi1>
      %61 = vector.broadcast %60 : vector<10x128xi1> to vector<10x128xi1>
      %62 = arith.xori %58, %61 : vector<10x128xi1>
      %63 = arith.andi %62, %56 : vector<10x128xi1>
      %64 = vector.broadcast %52 : i32 to vector<10x128xi32>
      %65 = arith.addi %54, %64 : vector<10x128xi32>
      %66 = arith.select %63, %65, %54 : vector<10x128xi1>, vector<10x128xi32>
      %67 = arith.cmpi eq, %66, %50 : vector<10x128xi32>
      %68 = arith.extui %67 : vector<10x128xi1> to vector<10x128xi32>
      %69 = arith.sitofp %68 : vector<10x128xi32> to vector<10x128xf32>
      %cst_28 = arith.constant dense<0.000000e+00> : vector<32x128xf32>
      %70 = tpu.matmul %48, %69, %cst_28 {dimension_numbers = #tpu.dot_dimension_numbers<[0], [0], [1], [1], [0, 1, 1, 1], [], []>} : vector<10x32xf32>, vector<10x128xf32>, vector<32x128xf32> -> vector<32x128xf32>
      %71 = arith.mulf %70, %70 : vector<32x128xf32>
      %cst_29 = arith.constant dense<0.000000e+00> : vector<128xf32>
      %72 = vector.multi_reduction <add>, %71, %cst_29 [0] : vector<32x128xf32> to vector<128xf32>
      %73 = vector.shape_cast %72 : vector<128xf32> to vector<1x128xf32>
      %cst_30 = arith.constant 1.000000e-24 : f32
      %74 = vector.broadcast %cst_30 : f32 to vector<1x128xf32>
      %75 = arith.maximumf %73, %74 : vector<1x128xf32>
      %76 = math.rsqrt %75 : vector<1x128xf32>
      %77 = vector.broadcast %76 : vector<1x128xf32> to vector<32x128xf32>
      %78 = arith.mulf %70, %77 : vector<32x128xf32>
      %c0_31 = arith.constant 0 : index
      %c0_32 = arith.constant 0 : index
      %79 = vector.load %arg6[%c0_31, %c0_32] : memref<32x128xf32, #tpu.memory_space<vmem>>, vector<32x128xf32>
      tpu.vector_store %arg6[%c0_31, %c0_32], %78 {strides = array<i32>} : memref<32x128xf32, #tpu.memory_space<vmem>>, vector<32x128xf32>,
    } else {
    }
    %c0 = arith.constant 0 : index
    %c0_1 = arith.constant 0 : index
    %c0_2 = arith.constant 0 : index
    %c0_3 = arith.constant 0 : index
    %3 = vector.load %arg3[%c0, %c0_1, %c0_2, %c0_3] : memref<1x6x16x32xf32, #tpu.memory_space<vmem>>, vector<1x6x16x32xf32>
    %4 = vector.shape_cast %3 : vector<1x6x16x32xf32> to vector<6x16x32xf32>
    %5 = arith.mulf %4, %4 : vector<6x16x32xf32>
    %cst = arith.constant dense<0.000000e+00> : vector<6x16xf32>
    %6 = vector.multi_reduction <add>, %5, %cst [2] : vector<6x16x32xf32> to vector<6x16xf32>
    %7 = vector.shape_cast %6 : vector<6x16xf32> to vector<6x16x1xf32>
    %cst_4 = arith.constant 1.000000e-24 : f32
    %8 = vector.broadcast %cst_4 : f32 to vector<6x16x1xf32>
    %9 = arith.maximumf %7, %8 : vector<6x16x1xf32>
    %10 = math.rsqrt %9 : vector<6x16x1xf32>
    %11 = vector.broadcast %10 : vector<6x16x1xf32> to vector<6x16x32xf32>
    %12 = arith.mulf %4, %11 : vector<6x16x32xf32>
    %cst_5 = arith.constant dense<0.000000e+00> : vector<6x32xf32>
    %13 = vector.multi_reduction <add>, %12, %cst_5 [1] : vector<6x16x32xf32> to vector<6x32xf32>
    %14 = arith.mulf %13, %13 : vector<6x32xf32>
    %cst_6 = arith.constant dense<0.000000e+00> : vector<6xf32>
    %15 = vector.multi_reduction <add>, %14, %cst_6 [1] : vector<6x32xf32> to vector<6xf32>
    %16 = vector.shape_cast %15 : vector<6xf32> to vector<6x1xf32>
    %cst_7 = arith.constant 1.000000e-24 : f32
    %17 = vector.broadcast %cst_7 : f32 to vector<6x1xf32>
    %18 = arith.maximumf %16, %17 : vector<6x1xf32>
    %19 = math.rsqrt %18 : vector<6x1xf32>
    %20 = vector.broadcast %19 : vector<6x1xf32> to vector<6x32xf32>
    %21 = arith.mulf %13, %20 : vector<6x32xf32>
    %c0_8 = arith.constant 0 : index
    %c0_9 = arith.constant 0 : index
    %22 = vector.load %arg6[%c0_8, %c0_9] : memref<32x128xf32, #tpu.memory_space<vmem>>, vector<32x128xf32>
    %cst_10 = arith.constant dense<0.000000e+00> : vector<6x128xf32>
    %23 = tpu.matmul %21, %22, %cst_10 {dimension_numbers = #tpu.dot_dimension_numbers<[1], [0], [0], [1], [0, 0, 1, 1], [], []>} : vector<6x32xf32>, vector<32x128xf32>, vector<6x128xf32> -> vector<6x128xf32>
    %c0_11 = arith.constant 0 : index
    %24 = memref.load %arg2[%c0_11] : memref<1xf32, #tpu.memory_space<smem>>
    %25 = vector.broadcast %24 : f32 to vector<6x128xf32>
    %26 = arith.mulf %25, %23 : vector<6x128xf32>
    %c0_12 = arith.constant 0 : index
    %c0_13 = arith.constant 0 : index
    %c0_14 = arith.constant 0 : index
    %27 = vector.load %arg5[%c0_12, %c0_13, %c0_14] : memref<1x6x128xf32, #tpu.memory_space<vmem>>, vector<1x6x128xf32>
    %28 = vector.shape_cast %27 : vector<1x6x128xf32> to vector<6x128xf32>
    %29 = vector.shape_cast %26 : vector<6x128xf32> to vector<1x6x128xf32>
    tpu.vector_store %arg5[%c0_12, %c0_13, %c0_14], %29 {strides = array<i32>} : memref<1x6x128xf32, #tpu.memory_space<vmem>>, vector<1x6x128xf32>,
    return
  }
  func.func @transform_0(%arg0: i32, %arg1: i32) -> i32 {
    %c0_i32 = arith.constant 0 : i32
    %c0_i32_0 = arith.constant 0 : i32
    return %c0_i32 : i32
  }
  func.func @transform_1(%arg0: i32, %arg1: i32) -> (i32, i32, i32, i32) {
    %c0_i32 = arith.constant 0 : i32
    %c0_i32_0 = arith.constant 0 : i32
    %c0_i32_1 = arith.constant 0 : i32
    return %arg0, %arg1, %c0_i32, %c0_i32_0 : i32, i32, i32, i32
  }
  func.func @transform_2(%arg0: i32, %arg1: i32) -> (i32, i32, i32, i32) {
    %c0_i32 = arith.constant 0 : i32
    %c0_i32_0 = arith.constant 0 : i32
    %c0_i32_1 = arith.constant 0 : i32
    %c0_i32_2 = arith.constant 0 : i32
    return %arg0, %c0_i32, %c0_i32_0, %c0_i32_1 : i32, i32, i32, i32
  }
  func.func @transform_3(%arg0: i32, %arg1: i32) -> (i32, i32, i32) {
    %c0_i32 = arith.constant 0 : i32
    %c0_i32_0 = arith.constant 0 : i32
    return %arg0, %arg1, %c0_i32 : i32, i32, i32
  }
}

</mosaic_0001>

<llo_original>
// kernel: tpu_custom_call.1
$region0: #{tpu_custom_call.1}
  #allocation0 [shape = 'u32[]', space=smem, size = 0x4, offset = 0x4, fixed_abs, tag = 'smem constant byte address 0x4 - core index']
  #allocation1 [shape = 'u32[144,128]{1,0:T(1,128)}', space=vmem, size = 0x12000, scoped, tag = 'internal scratch']
  #allocation2 [shape = 'f32[32,128]{1,0:T(8,128)}', space=vmem, size = 0x4000, scoped, tag = 'scratch operand']
  #allocation3 [shape = 'f32[1]{0:T(128)S(6)}', space=smem, size = 0x200, scoped, tag = 'scoped memory for tpu_custom_call.1']
  %s0 = inlined_call_operand.<no memory space> [shape: f32[1], index: 0, kind: input, shape index: {}]
  %s1 = inlined_call_operand.hbm [shape: f32[2,6,16,32], index: 1, kind: input, shape index: {}]
  %s2 = inlined_call_operand.hbm [shape: f32[2,10,16,32], index: 2, kind: input, shape index: {}]
  %s3 = inlined_call_operand.vmem [shape: f32[2,6,128], index: 3, kind: output, shape index: {}]
  %s4 = sld [smem:[#allocation0]]
  $region57: #{tpu_custom_call.1} parent=0
    _
  %s6 = ssub.s32 1, %s4
  %s7 = scalar_select 0, %s6, %s4
  %8 = sst [smem:[#allocation3]] %s0
  $region1: #{tpu_custom_call.1} parent=0
    #allocation4 [shape = 'u8[98304]{0}', space=vmem, size = 0x18000, scoped, tag = 'input window, operand 1']
    #allocation5 [shape = 's32[2]{0}', space=sflag, size = 0x8, scoped, tag = 'scoped memory for tpu_custom_call.1']
    #allocation6 [shape = 'u8[163840]{0}', space=vmem, size = 0x28000, scoped, tag = 'input window, operand 2']
    #allocation7 [shape = 's32[2]{0}', space=sflag, size = 0x8, scoped, tag = 'scoped memory for tpu_custom_call.1']
    %9 = vsyncpa [#allocation5], 0
    %s10 = scalar_lea.sflag [#allocation5], 1
    %11 = vsyncpa %s10, 0
    %12 = vsyncpa [#allocation7], 0
    %s13 = scalar_lea.sflag [#allocation7], 1
    %14 = vsyncpa %s13, 0
    loop: start=0, step=1, limit=4
    $region2: #{tpu_custom_call.1} parent=1 // loop_pre_header
      _
    $region3: #{tpu_custom_call.1} parent=1 // loop_header
      %s16 = sphi 0, %s20
      %p17 = scmp.ge.s32.totalorder %s16, 4
      %s23 = sphi 0, %s35
      %s24 = sphi 0, %s31
      %s25 = sphi 0, %s23
      %s26 = sphi 0, %s24
      %s27 = sphi 0, %s25
      %s28 = sphi 0, %s26
      %s36 = sphi 0, %s36
      %s38 = sphi 0, %s36
      %s39 = sphi 0, %s38
      %s53 = sphi 0, %s39
      %s61 = sphi 0, %s63
      %s64 = sphi 0, %s61
      %s65 = sphi 0, %s64
      %s81 = sphi 0, %s65
      %s87 = sphi 0, %s89
      %s90 = sphi 0, %s87
      %s91 = sphi 0, %s90
      %s107 = sphi 0, %s91
      %s115 = sphi 0, %s117
      %s118 = sphi 0, %s115
      %s119 = sphi 0, %s118
      %s135 = sphi 0, %s119
    $region4: #{tpu_custom_call.1} parent=1 // loop_header_branch
      %19 = sbr.rel (%p17) target = $region8
    $region5: #{tpu_custom_call.1} parent=1 // loop_body
      %s21 = ssub.s32 %s16, 1
      %s22 = ssub.s32 %s16, 2
      %s29 = sadd.s32 1, %s24
      %p30 = scmp.ge.s32.totalorder %s29, 1
      %s31 = scalar_select %p30, 0, %s29
      %s32 = sadd.s32 1, %s23
      %s33 = scalar_select %p30, %s32, %s23
      %p34 = scmp.ge.s32.totalorder %s33, 2
      %s35 = scalar_select %p34, 0, %s33
      %s37 = sadd.s32 %s36, 1
      %p40 = scmp.eq.s32.totalorder %s16, 1
      %p41 = scmp.ne.s32.totalorder %s36, %s38
      %p42 = scmp.eq.s32.totalorder %s16, 0
      %p43 = por %p41, %p42
      %p44 = scmp.ne.s32.totalorder %s36, %s38
      %p45 = scmp.eq.s32.totalorder %s21, 1
      %p46 = por %p44, %p45
      %p47 = scmp.ne.s32.totalorder %s38, %s39
      %p48 = scmp.eq.s32.totalorder %s21, 0
      %p49 = por %p47, %p48
      %p50 = scmp.ne.s32.totalorder %s38, %s39
      %p51 = scmp.eq.s32.totalorder %s22, 1
      %p52 = por %p50, %p51
      %p54 = scmp.ne.s32.totalorder %s39, %s53
      %p55 = scmp.eq.s32.totalorder %s22, 0
      %p56 = por %p54, %p55
      %s57 = ssub.s32 %s23, %s35
      %s58 = ssub.s32 %s24, %s31
      %s59 = sor.u32 %s57, %s58
      %p60 = scmp.eq.s32.totalorder %s59, 0
      %s62 = sadd.s32 %s61, 1
      %s63 = scalar_select %p60, %s61, %s62
      %p66 = pneg %p60
      %p67 = scmp.eq.s32.totalorder %s16, 1
      %p68 = por %p66, %p67
      %p69 = scmp.ne.s32.totalorder %s61, %s64
      %p70 = scmp.eq.s32.totalorder %s16, 0
      %p71 = por %p69, %p70
      %p72 = scmp.ne.s32.totalorder %s61, %s64
      %p73 = scmp.eq.s32.totalorder %s21, 1
      %p74 = por %p72, %p73
      %p75 = scmp.ne.s32.totalorder %s64, %s65
      %p76 = scmp.eq.s32.totalorder %s21, 0
      %p77 = por %p75, %p76
      %p78 = scmp.ne.s32.totalorder %s64, %s65
      %p79 = scmp.eq.s32.totalorder %s22, 1
      %p80 = por %p78, %p79
      %p82 = scmp.ne.s32.totalorder %s65, %s81
      %p83 = scmp.eq.s32.totalorder %s22, 0
      %p84 = por %p82, %p83
      %s85 = ssub.s32 %s23, %s35
      %p86 = scmp.eq.s32.totalorder %s85, 0
      %s88 = sadd.s32 %s87, 1
      %s89 = scalar_select %p86, %s87, %s88
      %p92 = pneg %p86
      %p93 = scmp.eq.s32.totalorder %s16, 1
      %p94 = por %p92, %p93
      %p95 = scmp.ne.s32.totalorder %s87, %s90
      %p96 = scmp.eq.s32.totalorder %s16, 0
      %p97 = por %p95, %p96
      %p98 = scmp.ne.s32.totalorder %s87, %s90
      %p99 = scmp.eq.s32.totalorder %s21, 1
      %p100 = por %p98, %p99
      %p101 = scmp.ne.s32.totalorder %s90, %s91
      %p102 = scmp.eq.s32.totalorder %s21, 0
      %p103 = por %p101, %p102
      %p104 = scmp.ne.s32.totalorder %s90, %s91
      %p105 = scmp.eq.s32.totalorder %s22, 1
      %p106 = por %p104, %p105
      %p108 = scmp.ne.s32.totalorder %s91, %s107
      %p109 = scmp.eq.s32.totalorder %s22, 0
      %p110 = por %p108, %p109
      %s111 = ssub.s32 %s23, %s35
      %s112 = ssub.s32 %s24, %s31
      %s113 = sor.u32 %s111, %s112
      %p114 = scmp.eq.s32.totalorder %s113, 0
      %s116 = sadd.s32 %s115, 1
      %s117 = scalar_select %p114, %s115, %s116
      %p120 = pneg %p114
      %p121 = scmp.eq.s32.totalorder %s16, 1
      %p122 = por %p120, %p121
      %p123 = scmp.ne.s32.totalorder %s115, %s118
      %p124 = scmp.eq.s32.totalorder %s16, 0
      %p125 = por %p123, %p124
      %p126 = scmp.ne.s32.totalorder %s115, %s118
      %p127 = scmp.eq.s32.totalorder %s21, 1
      %p128 = por %p126, %p127
      %p129 = scmp.ne.s32.totalorder %s118, %s119
      %p130 = scmp.eq.s32.totalorder %s21, 0
      %p131 = por %p129, %p130
      %p132 = scmp.ne.s32.totalorder %s118, %s119
      %p133 = scmp.eq.s32.totalorder %s22, 1
      %p134 = por %p132, %p133
      %p136 = scmp.ne.s32.totalorder %s119, %s135
      %p137 = scmp.eq.s32.totalorder %s22, 0
      %p138 = por %p136, %p137
      %p139 = scmp.le.s32.totalorder 1, %s16
      %p140 = scmp.lt.s32.totalorder %s16, 3
      %p141 = pnand %p139, %p140
      %p142 = pneg %p141
      // Predicated region
      $region9: #{tpu_custom_call.1} parent=5 // pred_check
        _
      $region10: #{tpu_custom_call.1} parent=5 // pred_check_branch
        %144 = sbr.rel (%p141) target = $region12
      $region11: #{tpu_custom_call.1} parent=5 // pred_region
        %s145 = ssub.s32 %s16, 1
        // Predicated region
        $region13: #{tpu_custom_call.1} parent=11 // pred_check
          %p146 = pneg %p49
        $region14: #{tpu_custom_call.1} parent=11 // pred_check_branch
          %148 = sbr.rel (%p146) target = $region16
        $region15: #{tpu_custom_call.1} parent=11 // pred_region
          _
        $region16: #{tpu_custom_call.1} parent=11 // pred_fallthru
          _
      $region12: #{tpu_custom_call.1} parent=5 // pred_fallthru
        _
      %p149 = scmp.lt.s32.totalorder %s16, 2
      // Predicated region
      $region17: #{tpu_custom_call.1} parent=5 // pred_check
        %p150 = pneg %p149
      $region18: #{tpu_custom_call.1} parent=5 // pred_check_branch
        %152 = sbr.rel (%p150) target = $region20
      $region19: #{tpu_custom_call.1} parent=5 // pred_region
        // Predicated region
        $region21: #{tpu_custom_call.1} parent=19 // pred_check
          %p153 = pneg %p71
        $region22: #{tpu_custom_call.1} parent=19 // pred_check_branch
          %155 = sbr.rel (%p153) target = $region24
        $region23: #{tpu_custom_call.1} parent=19 // pred_region
          %s156 = sand.u32 %s61, 1
          %s157 = scalar_lea.sflag [#allocation5], %s156
          %s158 = sand.u32 %s61, 1
          %s159 = smul.addr %s158, 96
          %s160 = scalar_lea.vmem [#allocation4], %s159
          %s161 = smul.u32 6, %s24
          %s163 = ssub.s32 1536, 1536
          %164 = vsyncadd %s157, %s163
          %s165 = smul.addr %s161, 2
          %s166 = smul.addr %s23, 12
          %s167 = sadd.s32 %s165, %s166
          %s168 = smul.addr %s167, 128
          %s169 = scalar_lea.hbm %s1, %s168
          %s170 = sshll.u32 %s160, 4
          %s171 = int_to_ptr.vmem [resolvable:$true] %s170
          %176 = dma.hbm_to_vmem [thread:$0]  %s169, 1536, %s171, %s157, 128, 128, 8
        $region24: #{tpu_custom_call.1} parent=19 // pred_fallthru
          _
        // Predicated region
        $region25: #{tpu_custom_call.1} parent=19 // pred_check
          %p177 = pneg %p97
        $region26: #{tpu_custom_call.1} parent=19 // pred_check_branch
          %179 = sbr.rel (%p177) target = $region28
        $region27: #{tpu_custom_call.1} parent=19 // pred_region
          %s180 = sand.u32 %s87, 1
          %s181 = scalar_lea.sflag [#allocation7], %s180
          %s182 = sand.u32 %s87, 1
          %s183 = smul.addr %s182, 160
          %s184 = scalar_lea.vmem [#allocation6], %s183
          %s186 = ssub.s32 2560, 2560
          %187 = vsyncadd %s181, %s186
          %s188 = smul.addr %s23, 20
          %s189 = smul.addr %s188, 128
          %s190 = scalar_lea.hbm %s2, %s189
          %s191 = sshll.u32 %s184, 4
          %s192 = int_to_ptr.vmem [resolvable:$true] %s191
          %197 = dma.hbm_to_vmem [thread:$0]  %s190, 2560, %s192, %s181, 128, 128, 8
        $region28: #{tpu_custom_call.1} parent=19 // pred_fallthru
          _
      $region20: #{tpu_custom_call.1} parent=5 // pred_fallthru
        _
      %p198 = scmp.le.s32.totalorder 1, %s16
      %p199 = scmp.lt.s32.totalorder %s16, 3
      %p200 = pnand %p198, %p199
      %p201 = pneg %p200
      // Predicated region
      $region29: #{tpu_custom_call.1} parent=5 // pred_check
        _
      $region30: #{tpu_custom_call.1} parent=5 // pred_check_branch
        %203 = sbr.rel (%p200) target = $region32
      $region31: #{tpu_custom_call.1} parent=5 // pred_region
        %s204 = ssub.s32 %s16, 1
        %s205 = sand.u32 %s64, 1
        %s206 = scalar_lea.sflag [#allocation5], %s205
        %s207 = sand.u32 %s64, 1
        %s208 = smul.addr %s207, 96
        %s209 = scalar_lea.vmem [#allocation4], %s208
        // Predicated region
        $region33: #{tpu_custom_call.1} parent=31 // pred_check
          %p210 = pneg %p77
        $region34: #{tpu_custom_call.1} parent=31 // pred_check_branch
          %212 = sbr.rel (%p210) target = $region36
        $region35: #{tpu_custom_call.1} parent=31 // pred_region
          %213 = dma.done %s206, 1536
        $region36: #{tpu_custom_call.1} parent=31 // pred_fallthru
          _
        %s214 = sand.u32 %s90, 1
        %s215 = scalar_lea.sflag [#allocation7], %s214
        %s216 = sand.u32 %s90, 1
        %s217 = smul.addr %s216, 160
        %s218 = scalar_lea.vmem [#allocation6], %s217
        // Predicated region
        $region37: #{tpu_custom_call.1} parent=31 // pred_check
          %p219 = pneg %p103
        $region38: #{tpu_custom_call.1} parent=31 // pred_check_branch
          %221 = sbr.rel (%p219) target = $region40
        $region39: #{tpu_custom_call.1} parent=31 // pred_region
          %222 = dma.done %s215, 2560
        $region40: #{tpu_custom_call.1} parent=31 // pred_fallthru
          _
        %p223 = pneg %p49
        %p224 = pneg %p46
        %s225 = sand.u32 %s64, 1
        %s226 = scalar_lea.sflag [#allocation5], %s225
        %s227 = sand.u32 %s64, 1
        %s228 = smul.addr %s227, 96
        %s229 = scalar_lea.vmem [#allocation4], %s228
        %p230 = pneg %p77
        %p231 = pneg %p74
        %s232 = sand.u32 %s90, 1
        %s233 = scalar_lea.sflag [#allocation7], %s232
        %s234 = sand.u32 %s90, 1
        %s235 = smul.addr %s234, 160
        %s236 = scalar_lea.vmem [#allocation6], %s235
        %p237 = pneg %p103
        %p238 = pneg %p100
        %p239 = pneg %p131
        %p240 = pneg %p128
        %p241 = scmp.lt.s32.totalorder %s25, 1
        %s242 = scalar_select %p241, %s25, 1
        %p243 = scmp.lt.s32.totalorder %s26, 0
        %s244 = scalar_select %p243, %s26, 0
        %s245 = sadd.s32 %s244, %s242
        %s246 = smul.addr %s245, 8
        %s247 = scalar_lea.vmem %s3, %s246
        %s248 = smul.u32 6, %s26
        %p249 = scmp.lt.s32.totalorder %s25, 1
        %s250 = scalar_select %p249, %s25, 1
        %p251 = scmp.lt.s32.totalorder %s26, 0
        %s252 = scalar_select %p251, %s26, 0
        %s253 = sadd.s32 %s252, %s250
        %s254 = smul.addr %s253, 8
        %s255 = scalar_lea.vmem %s3, %s254
        %p256 = scmp.eq.s32.totalorder %s26, 0
        // Predicated region
        $region41: #{tpu_custom_call.1} parent=31 // pred_check
          %p257 = pneg %p256
        $region42: #{tpu_custom_call.1} parent=31 // pred_check_branch
          %259 = sbr.rel (%p257) target = $region44
        $region43: #{tpu_custom_call.1} parent=31 // pred_region
          %v260 = vld [vmem:[%s218] sm:$0xff]
          %v261 = vld [vmem:[%s218 + $0x8] sm:$0xff]
          %v262 = vld [vmem:[%s218 + $0x10] sm:$0xff]
          %v263 = vld [vmem:[%s218 + $0x18] sm:$0xff]
          %v264 = vld [vmem:[%s218 + $0x20] sm:$0xff]
          %v265 = vld [vmem:[%s218 + $0x28] sm:$0xff]
          %v266 = vld [vmem:[%s218 + $0x30] sm:$0xff]
          %v267 = vld [vmem:[%s218 + $0x38] sm:$0xff]
          %v268 = vld [vmem:[%s218 + $0x40] sm:$0xff]
          %v269 = vld [vmem:[%s218 + $0x48] sm:$0xff]
          %v270 = vld [vmem:[%s218 + $0x50] sm:$0xff]
          %v271 = vld [vmem:[%s218 + $0x58] sm:$0xff]
          %v272 = vld [vmem:[%s218 + $0x60] sm:$0xff]
          %v273 = vld [vmem:[%s218 + $0x68] sm:$0xff]
          %v274 = vld [vmem:[%s218 + $0x70] sm:$0xff]
          %v275 = vld [vmem:[%s218 + $0x78] sm:$0xff]
          %v276 = vld [vmem:[%s218 + $0x80] sm:$0xff]
          %v277 = vld [vmem:[%s218 + $0x88] sm:$0xff]
          %v278 = vld [vmem:[%s218 + $0x90] sm:$0xff]
          %v279 = vld [vmem:[%s218 + $0x98] sm:$0xff]
          %v280 = vmul.f32 %v260, %v260
          %v281 = vmul.f32 %v261, %v261
          %v282 = vmul.f32 %v262, %v262
          %v283 = vmul.f32 %v263, %v263
          %v284 = vmul.f32 %v264, %v264
          %v285 = vmul.f32 %v265, %v265
          %v286 = vmul.f32 %v266, %v266
          %v287 = vmul.f32 %v267, %v267
          %v288 = vmul.f32 %v268, %v268
          %v289 = vmul.f32 %v269, %v269
          %v290 = vmul.f32 %v270, %v270
          %v291 = vmul.f32 %v271, %v271
          %v292 = vmul.f32 %v272, %v272
          %v293 = vmul.f32 %v273, %v273
          %v294 = vmul.f32 %v274, %v274
          %v295 = vmul.f32 %v275, %v275
          %v296 = vmul.f32 %v276, %v276
          %v297 = vmul.f32 %v277, %v277
          %v298 = vmul.f32 %v278, %v278
          %v299 = vmul.f32 %v279, %v279
          %vm300 = vcmask 261120
          %v301 = vsel %vm300, %v280, 0.0
          %302 = vadd.xlane.f32.xlu0 %v301
          %v303 = vpop.xlane.xlu0 %302
          %v304 = vsel %vm300, %v281, 0.0
          %305 = vadd.xlane.f32.xlu0 %v304
          %v306 = vpop.xlane.xlu0 %305
          %v307 = vsel %vm300, %v282, 0.0
          %308 = vadd.xlane.f32.xlu0 %v307
          %v309 = vpop.xlane.xlu0 %308
          %v310 = vsel %vm300, %v283, 0.0
          %311 = vadd.xlane.f32.xlu0 %v310
          %v312 = vpop.xlane.xlu0 %311
          %v313 = vsel %vm300, %v284, 0.0
          %314 = vadd.xlane.f32.xlu0 %v313
          %v315 = vpop.xlane.xlu0 %314
          %v316 = vsel %vm300, %v285, 0.0
          %317 = vadd.xlane.f32.xlu0 %v316
          %v318 = vpop.xlane.xlu0 %317
          %v319 = vsel %vm300, %v286, 0.0
          %320 = vadd.xlane.f32.xlu0 %v319
          %v321 = vpop.xlane.xlu0 %320
          %v322 = vsel %vm300, %v287, 0.0
          %323 = vadd.xlane.f32.xlu0 %v322
          %v324 = vpop.xlane.xlu0 %323
          %v325 = vsel %vm300, %v288, 0.0
          %326 = vadd.xlane.f32.xlu0 %v325
          %v327 = vpop.xlane.xlu0 %326
          %v328 = vsel %vm300, %v289, 0.0
          %329 = vadd.xlane.f32.xlu0 %v328
          %v330 = vpop.xlane.xlu0 %329
          %v331 = vsel %vm300, %v290, 0.0
          %332 = vadd.xlane.f32.xlu0 %v331
          %v333 = vpop.xlane.xlu0 %332
          %v334 = vsel %vm300, %v291, 0.0
          %335 = vadd.xlane.f32.xlu0 %v334
          %v336 = vpop.xlane.xlu0 %335
          %v337 = vsel %vm300, %v292, 0.0
          %338 = vadd.xlane.f32.xlu0 %v337
          %v339 = vpop.xlane.xlu0 %338
          %v340 = vsel %vm300, %v293, 0.0
          %341 = vadd.xlane.f32.xlu0 %v340
          %v342 = vpop.xlane.xlu0 %341
          %v343 = vsel %vm300, %v294, 0.0
          %344 = vadd.xlane.f32.xlu0 %v343
          %v345 = vpop.xlane.xlu0 %344
          %v346 = vsel %vm300, %v295, 0.0
          %347 = vadd.xlane.f32.xlu0 %v346
          %v348 = vpop.xlane.xlu0 %347
          %v349 = vsel %vm300, %v296, 0.0
          %350 = vadd.xlane.f32.xlu0 %v349
          %v351 = vpop.xlane.xlu0 %350
          %v352 = vsel %vm300, %v297, 0.0
          %353 = vadd.xlane.f32.xlu0 %v352
          %v354 = vpop.xlane.xlu0 %353
          %v355 = vsel %vm300, %v298, 0.0
          %356 = vadd.xlane.f32.xlu0 %v355
          %v357 = vpop.xlane.xlu0 %356
          %v358 = vsel %vm300, %v299, 0.0
          %359 = vadd.xlane.f32.xlu0 %v358
          %v360 = vpop.xlane.xlu0 %359
          %v361 = vmax.f32 %v303, 1e-24
          %v362 = vmax.f32 %v306, 1e-24
          %v363 = vmax.f32 %v309, 1e-24
          %v364 = vmax.f32 %v312, 1e-24
          %v365 = vmax.f32 %v315, 1e-24
          %v366 = vmax.f32 %v318, 1e-24
          %v367 = vmax.f32 %v321, 1e-24
          %v368 = vmax.f32 %v324, 1e-24
          %v369 = vmax.f32 %v327, 1e-24
          %v370 = vmax.f32 %v330, 1e-24
          %v371 = vmax.f32 %v333, 1e-24
          %v372 = vmax.f32 %v336, 1e-24
          %v373 = vmax.f32 %v339, 1e-24
          %v374 = vmax.f32 %v342, 1e-24
          %v375 = vmax.f32 %v345, 1e-24
          %v376 = vmax.f32 %v348, 1e-24
          %v377 = vmax.f32 %v351, 1e-24
          %v378 = vmax.f32 %v354, 1e-24
          %v379 = vmax.f32 %v357, 1e-24
          %v380 = vmax.f32 %v360, 1e-24
          %v381 = vrsqrt.pop %v361
          %v382 = vrsqrt.pop %v362
          %v383 = vrsqrt.pop %v363
          %v384 = vrsqrt.pop %v364
          %v385 = vrsqrt.pop %v365
          %v386 = vrsqrt.pop %v366
          %v387 = vrsqrt.pop %v367
          %v388 = vrsqrt.pop %v368
          %v389 = vrsqrt.pop %v369
          %v390 = vrsqrt.pop %v370
          %v391 = vrsqrt.pop %v371
          %v392 = vrsqrt.pop %v372
          %v393 = vrsqrt.pop %v373
          %v394 = vrsqrt.pop %v374
          %v395 = vrsqrt.pop %v375
          %v396 = vrsqrt.pop %v376
          %v397 = vrsqrt.pop %v377
          %v398 = vrsqrt.pop %v378
          %v399 = vrsqrt.pop %v379
          %v400 = vrsqrt.pop %v380
          %v401 = vmul.f32 %v260, %v381
          %v402 = vmul.f32 %v261, %v382
          %v403 = vmul.f32 %v262, %v383
          %v404 = vmul.f32 %v263, %v384
          %v405 = vmul.f32 %v264, %v385
          %v406 = vmul.f32 %v265, %v386
          %v407 = vmul.f32 %v266, %v387
          %v408 = vmul.f32 %v267, %v388
          %v409 = vmul.f32 %v268, %v389
          %v410 = vmul.f32 %v269, %v390
          %v411 = vmul.f32 %v270, %v391
          %v412 = vmul.f32 %v271, %v392
          %v413 = vmul.f32 %v272, %v393
          %v414 = vmul.f32 %v273, %v394
          %v415 = vmul.f32 %v274, %v395
          %v416 = vmul.f32 %v275, %v396
          %v417 = vmul.f32 %v276, %v397
          %v418 = vmul.f32 %v277, %v398
          %v419 = vmul.f32 %v278, %v399
          %v420 = vmul.f32 %v279, %v400
          %v421 = vsel %vm300, %v401, 0.0
          %v422 = vsel %vm300, %v402, 0.0
          %v423 = vadd.f32 %v421, %v422
          %v424 = vrot.slane %v423, 4
          %v425 = vadd.f32 %v423, %v424
          %v426 = vrot.slane %v425, 2
          %v427 = vadd.f32 %v425, %v426
          %v428 = vrot.slane %v427, 1
          %v429 = vadd.f32 %v427, %v428
          %v430 = vsel %vm300, %v403, 0.0
          %v431 = vsel %vm300, %v404, 0.0
          %v432 = vadd.f32 %v430, %v431
          %v433 = vrot.slane %v432, 4
          %v434 = vadd.f32 %v432, %v433
          %v435 = vrot.slane %v434, 2
          %v436 = vadd.f32 %v434, %v435
          %v437 = vrot.slane %v436, 1
          %v438 = vadd.f32 %v436, %v437
          %v439 = vsel %vm300, %v405, 0.0
          %v440 = vsel %vm300, %v406, 0.0
          %v441 = vadd.f32 %v439, %v440
          %v442 = vrot.slane %v441, 4
          %v443 = vadd.f32 %v441, %v442
          %v444 = vrot.slane %v443, 2
          %v445 = vadd.f32 %v443, %v444
          %v446 = vrot.slane %v445, 1
          %v447 = vadd.f32 %v445, %v446
          %v448 = vsel %vm300, %v407, 0.0
          %v449 = vsel %vm300, %v408, 0.0
          %v450 = vadd.f32 %v448, %v449
          %v451 = vrot.slane %v450, 4
          %v452 = vadd.f32 %v450, %v451
          %v453 = vrot.slane %v452, 2
          %v454 = vadd.f32 %v452, %v453
          %v455 = vrot.slane %v454, 1
          %v456 = vadd.f32 %v454, %v455
          %v457 = vsel %vm300, %v409, 0.0
          %v458 = vsel %vm300, %v410, 0.0
          %v459 = vadd.f32 %v457, %v458
          %v460 = vrot.slane %v459, 4
          %v461 = vadd.f32 %v459, %v460
          %v462 = vrot.slane %v461, 2
          %v463 = vadd.f32 %v461, %v462
          %v464 = vrot.slane %v463, 1
          %v465 = vadd.f32 %v463, %v464
          %v466 = vsel %vm300, %v411, 0.0
          %v467 = vsel %vm300, %v412, 0.0
          %v468 = vadd.f32 %v466, %v467
          %v469 = vrot.slane %v468, 4
          %v470 = vadd.f32 %v468, %v469
          %v471 = vrot.slane %v470, 2
          %v472 = vadd.f32 %v470, %v471
          %v473 = vrot.slane %v472, 1
          %v474 = vadd.f32 %v472, %v473
          %v475 = vsel %vm300, %v413, 0.0
          %v476 = vsel %vm300, %v414, 0.0
          %v477 = vadd.f32 %v475, %v476
          %v478 = vrot.slane %v477, 4
          %v479 = vadd.f32 %v477, %v478
          %v480 = vrot.slane %v479, 2
          %v481 = vadd.f32 %v479, %v480
          %v482 = vrot.slane %v481, 1
          %v483 = vadd.f32 %v481, %v482
          %v484 = vsel %vm300, %v415, 0.0
          %v485 = vsel %vm300, %v416, 0.0
          %v486 = vadd.f32 %v484, %v485
          %v487 = vrot.slane %v486, 4
          %v488 = vadd.f32 %v486, %v487
          %v489 = vrot.slane %v488, 2
          %v490 = vadd.f32 %v488, %v489
          %v491 = vrot.slane %v490, 1
          %v492 = vadd.f32 %v490, %v491
          %v493 = vsel %vm300, %v417, 0.0
          %v494 = vsel %vm300, %v418, 0.0
          %v495 = vadd.f32 %v493, %v494
          %v496 = vrot.slane %v495, 4
          %v497 = vadd.f32 %v495, %v496
          %v498 = vrot.slane %v497, 2
          %v499 = vadd.f32 %v497, %v498
          %v500 = vrot.slane %v499, 1
          %v501 = vadd.f32 %v499, %v500
          %v502 = vsel %vm300, %v419, 0.0
          %v503 = vsel %vm300, %v420, 0.0
          %v504 = vadd.f32 %v502, %v503
          %v505 = vrot.slane %v504, 4
          %v506 = vadd.f32 %v504, %v505
          %v507 = vrot.slane %v506, 2
          %v508 = vadd.f32 %v506, %v507
          %v509 = vrot.slane %v508, 1
          %v510 = vadd.f32 %v508, %v509
          %v511 = vmul.f32 %v429, %v429
          %v512 = vmul.f32 %v438, %v438
          %v513 = vmul.f32 %v447, %v447
          %v514 = vmul.f32 %v456, %v456
          %v515 = vmul.f32 %v465, %v465
          %v516 = vmul.f32 %v474, %v474
          %v517 = vmul.f32 %v483, %v483
          %v518 = vmul.f32 %v492, %v492
          %v519 = vmul.f32 %v501, %v501
          %v520 = vmul.f32 %v510, %v510
          %vm531 = vcmask 1041409
          %v532 = vsel %vm531, %v512, %v511
          %vm533 = vcmask 1042434
          %v534 = vsel %vm533, %v513, %v532
          %vm535 = vcmask 1043459
          %v536 = vsel %vm535, %v514, %v534
          %vm537 = vcmask 1044484
          %v538 = vsel %vm537, %v515, %v536
          %vm539 = vcmask 1045509
          %v540 = vsel %vm539, %v516, %v538
          %vm541 = vcmask 1046534
          %v542 = vsel %vm541, %v517, %v540
          %vm543 = vcmask 1047559
          %v544 = vsel %vm543, %v518, %v542
          %v545 = vsel %vm531, %v520, %v519
          %v548 = vsel %vm300, %v544, 0.0
          %549 = vadd.xlane.f32.xlu0 %v548
          %v550 = vpop.xlane.xlu0 %549
          %vm551 = vcmask 254976
          %v552 = vsel %vm551, %v545, 0.0
          %553 = vadd.xlane.f32.xlu0 %v552
          %v554 = vpop.xlane.xlu0 %553
          %v555 = vmax.f32 %v550, 1e-24
          %v556 = vmax.f32 %v554, 1e-24
          %v557 = vrsqrt.pop %v555
          %v558 = vrsqrt.pop %v556
          %v561 = vrot.slane %v557, 1
          %v562 = vrot.slane %v557, 2
          %v563 = vrot.slane %v557, 3
          %v564 = vrot.slane %v557, 4
          %v565 = vrot.slane %v557, 5
          %v566 = vrot.slane %v557, 6
          %v567 = vrot.slane %v557, 7
          %v568 = vrot.slane %v558, 1
          %v579 = vmul.f32 %v429, %v557
          %v580 = vmul.f32 %v438, %v561
          %v581 = vmul.f32 %v447, %v562
          %v582 = vmul.f32 %v456, %v563
          %v583 = vmul.f32 %v465, %v564
          %v584 = vmul.f32 %v474, %v565
          %v585 = vmul.f32 %v483, %v566
          %v586 = vmul.f32 %v492, %v567
          %v587 = vmul.f32 %v501, %v558
          %v588 = vmul.f32 %v510, %v568
          %v589 = vlaneseq
          %v590 = vshrl.u32 %v589, 7
          %v591 = vadd.s32 %v590, 8
          %v592 = vlaneseq
          %v593 = vand.u32 %v592, 127
          %vm594 = vcmp.lt.s32.totalorder %v590, 0
          %v595 = vsub.s32 0, %v590
          %v596 = vsel %vm594, %v595, %v590
          %v597 = vmul.u32.u64.compose %v596, 3435973837
          %v598 = vextract.low.u32 %v597
          %v599 = vextract.high.u32 %v597
          %v600 = vshrl.u32 %v599, 2
          %v601 = vmul.u32 %v600, 5
          %v602 = vsub.s32 %v596, %v601
          %v603 = vsub.s32 0, %v602
          %v604 = vsel %vm594, %v603, %v602
          %vm605 = vcmp.lt.s32.totalorder %v591, 0
          %v606 = vsub.s32 0, %v591
          %v607 = vsel %vm605, %v606, %v591
          %v608 = vmul.u32.u64.compose %v607, 3435973837
          %v609 = vextract.low.u32 %v608
          %v610 = vextract.high.u32 %v608
          %v611 = vshrl.u32 %v610, 2
          %v612 = vmul.u32 %v611, 5
          %v613 = vsub.s32 %v607, %v612
          %v614 = vsub.s32 0, %v613
          %v615 = vsel %vm605, %v614, %v613
          %vm616 = vcmp.ne.s32.totalorder %v604, 0
          %vm617 = vcmp.ne.s32.totalorder %v615, 0
          %vm618 = vcmp.lt.s32.totalorder %v604, 0
          %vm619 = vcmp.lt.s32.totalorder %v615, 0
          %vm620 = vmand %vm618, %vm616
          %vm621 = vmand %vm619, %vm617
          %v622 = vadd.s32 %v604, 5
          %v623 = vadd.s32 %v615, 5
          %v624 = vsel %vm620, %v622, %v604
          %v625 = vsel %vm621, %v623, %v615
          %vm626 = vcmp.eq.s32.totalorder %v624, %v593
          %vm627 = vcmp.eq.s32.totalorder %v625, %v593
          %v628 = vsel %vm626, 1, 0
          %v629 = vsel %vm627, 1, 0
          %v630 = vcvt.s32.f32 %v628
          %v631 = vcvt.s32.f32 %v629
          %v642 = vrot.slane %v580, 7
          %v643 = vsel %vm531, %v642, %v579
          %v644 = vrot.slane %v581, 6
          %v645 = vsel %vm533, %v644, %v643
          %v646 = vrot.slane %v582, 5
          %v647 = vsel %vm535, %v646, %v645
          %v648 = vrot.slane %v583, 4
          %v649 = vsel %vm537, %v648, %v647
          %v650 = vrot.slane %v584, 3
          %v651 = vsel %vm539, %v650, %v649
          %v652 = vrot.slane %v585, 2
          %v653 = vsel %vm541, %v652, %v651
          %v654 = vrot.slane %v586, 1
          %v655 = vsel %vm543, %v654, %v653
          %v656 = vrot.slane %v588, 7
          %v657 = vsel %vm531, %v656, %v587
          %660 = vxpose.xlu0.b32.start [1/16] %v655, 128
          %661 = vxpose.xlu0.b32.cont [2/16] %v657, 128
          %662 = vxpose.xlu0.b32.cont [3/16] 0.0, 128
          %663 = vxpose.xlu0.b32.cont [4/16] 0.0, 128
          %664 = vxpose.xlu0.b32.cont [5/16] 0.0, 128
          %665 = vxpose.xlu0.b32.cont [6/16] 0.0, 128
          %666 = vxpose.xlu0.b32.cont [7/16] 0.0, 128
          %667 = vxpose.xlu0.b32.cont [8/16] 0.0, 128
          %668 = vxpose.xlu0.b32.cont [9/16] 0.0, 128
          %669 = vxpose.xlu0.b32.cont [10/16] 0.0, 128
          %670 = vxpose.xlu0.b32.cont [11/16] 0.0, 128
          %671 = vxpose.xlu0.b32.cont [12/16] 0.0, 128
          %672 = vxpose.xlu0.b32.cont [13/16] 0.0, 128
          %673 = vxpose.xlu0.b32.cont [14/16] 0.0, 128
          %674 = vxpose.xlu0.b32.cont [15/16] 0.0, 128
          %675 = vxpose.xlu0.b32.end [16/16] 0.0, 128
          %v676 = vpop.trf.xlu0
          %v677 = vpop.trf.xlu0
          %v678 = vpop.trf.xlu0
          %v679 = vpop.trf.xlu0
          %v680 = vpop.trf.xlu0
          %v681 = vpop.trf.xlu0
          %v682 = vpop.trf.xlu0
          %v683 = vpop.trf.xlu0
          %v684 = vpop.trf.xlu0
          %v685 = vpop.trf.xlu0
          %v686 = vpop.trf.xlu0
          %v687 = vpop.trf.xlu0
          %v688 = vpop.trf.xlu0
          %v689 = vpop.trf.xlu0
          %v690 = vpop.trf.xlu0
          %v691 = vpop.trf.xlu0
          %vm692 = vcmask 80896
          %v694 = vsel %vm692, %v676, 0
          %v697 = vsel %vm692, %v677, 0
          %v700 = vsel %vm692, %v678, 0
          %v703 = vsel %vm692, %v679, 0
          %vm705 = vcmask 1041408
          %v707 = vsel %vm705, %v631, 0
          %709 = vmatprep.subr.mxu0 0.0
          %710 = vmatpush1.msra.mxu0 %v630
          %711 = vmatprep.subr.mxu0 0.0
          %712 = vmatpush1.msra.mxu0 %v707
          %713 = vmatprep.subr.mxu0 0.0
          %714 = vmatpush1.msra.mxu0 0.0
          %715 = vmatprep.subr.mxu0 0.0
          %716 = vmatpush1.msra.mxu0 0.0
          %717 = vmatprep.subr.mxu0 0.0
          %718 = vmatpush1.msra.mxu0 0.0
          %719 = vmatprep.subr.mxu0 0.0
          %720 = vmatpush1.msra.mxu0 0.0
          %721 = vmatprep.subr.mxu0 0.0
          %722 = vmatpush1.msra.mxu0 0.0
          %723 = vmatprep.subr.mxu0 0.0
          %724 = vmatpush1.msra.mxu0 0.0
          %725 = vmatprep.subr.mxu0 0.0
          %726 = vmatpush1.msra.mxu0 0.0
          %727 = vmatprep.subr.mxu0 0.0
          %728 = vmatpush1.msra.mxu0 0.0
          %729 = vmatprep.subr.mxu0 0.0
          %730 = vmatpush1.msra.mxu0 0.0
          %731 = vmatprep.subr.mxu0 0.0
          %732 = vmatpush1.msra.mxu0 0.0
          %733 = vmatprep.subr.mxu0 0.0
          %734 = vmatpush1.msra.mxu0 0.0
          %735 = vmatprep.subr.mxu0 0.0
          %736 = vmatpush1.msra.mxu0 0.0
          %737 = vmatprep.subr.mxu0 0.0
          %738 = vmatpush1.msra.mxu0 0.0
          %739 = vmatprep.subr.mxu0 0.0
          %740 = vmatpush1.msra.mxu0 0.0
          %741 = vmatprep.subr.mxu0 0.0
          %742 = vmatpush1.msra.mxu0 0.0
          %743 = vmatprep.subr.mxu0 0.0
          %744 = vmatpush1.msra.mxu0 0.0
          %745 = vmatprep.subr.mxu0 0.0
          %746 = vmatpush1.msra.mxu0 0.0
          %747 = vmatprep.subr.mxu0 0.0
          %748 = vmatpush1.msra.mxu0 0.0
          %749 = vmatprep.subr.mxu0 0.0
          %750 = vmatpush1.msra.mxu0 0.0
          %751 = vmatprep.subr.mxu0 0.0
          %752 = vmatpush1.msra.mxu0 0.0
          %753 = vmatprep.subr.mxu0 0.0
          %754 = vmatpush1.msra.mxu0 0.0
          %755 = vmatprep.subr.mxu0 0.0
          %756 = vmatpush1.msra.mxu0 0.0
          %757 = vmatprep.subr.mxu0 0.0
          %758 = vmatpush1.msra.mxu0 0.0
          %759 = vmatprep.subr.mxu0 0.0
          %760 = vmatpush1.msra.mxu0 0.0
          %761 = vmatprep.subr.mxu0 0.0
          %762 = vmatpush1.msra.mxu0 0.0
          %763 = vmatprep.subr.mxu0 0.0
          %764 = vmatpush1.msra.mxu0 0.0
          %765 = vmatprep.subr.mxu0 0.0
          %766 = vmatpush1.msra.mxu0 0.0
          %767 = vmatprep.subr.mxu0 0.0
          %768 = vmatpush1.msra.mxu0 0.0
          %769 = vmatprep.subr.mxu0 0.0
          %770 = vmatpush1.msra.mxu0 0.0
          %771 = vmatprep.subr.mxu0 0.0
          %772 = vmatpush1.msra.mxu0 0.0
          %773 = vmatprep.mubr.f32.mxu0 0.0
          %774 = vmatmul.mubr.f32.gmra.mrb[0].mxu0 %v694
          %v775 = vpop.f32.mrb[0].mxu0
          %v776 = vadd.f32 0.0, %v775
          %v777 = vpop.f32.mrb[0].mxu0
          %778 = vmatprep.mubr.f32.mxu0 0.0
          %779 = vmatmul.mubr.f32.gmra.mrb[0].mxu0 %v697
          %v780 = vpop.f32.mrb[0].mxu0
          %v781 = vadd.f32 0.0, %v780
          %v782 = vpop.f32.mrb[0].mxu0
          %783 = vmatprep.mubr.f32.mxu0 0.0
          %784 = vmatmul.mubr.f32.gmra.mrb[0].mxu0 %v700
          %v785 = vpop.f32.mrb[0].mxu0
          %v786 = vadd.f32 0.0, %v785
          %v787 = vpop.f32.mrb[0].mxu0
          %788 = vmatprep.mubr.f32.mxu0 0.0
          %789 = vmatmul.mubr.f32.gmra.mrb[0].mxu0 %v703
          %v790 = vpop.f32.mrb[0].mxu0
          %v791 = vadd.f32 0.0, %v790
          %v792 = vpop.f32.mrb[0].mxu0
          %793 = vdwg.mxu0
          %v794 = vmul.f32 %v776, %v776
          %v795 = vmul.f32 %v781, %v781
          %v796 = vmul.f32 %v786, %v786
          %v797 = vmul.f32 %v791, %v791
          %v798 = vadd.f32 %v794, %v795
          %v799 = vadd.f32 %v798, %v796
          %v800 = vadd.f32 %v799, %v797
          %v801 = vrot.slane %v800, 4
          %v802 = vadd.f32 %v800, %v801
          %v803 = vrot.slane %v802, 2
          %v804 = vadd.f32 %v802, %v803
          %v805 = vrot.slane %v804, 1
          %v806 = vadd.f32 %v804, %v805
          %v807 = vmax.f32 %v806, 1e-24
          %v808 = vrsqrt.pop %v807
          %v809 = vmul.f32 %v776, %v808
          %v810 = vmul.f32 %v781, %v808
          %v811 = vmul.f32 %v786, %v808
          %v812 = vmul.f32 %v791, %v808
          %813 = vst [vmem:[#allocation2] sm:$0xff] %v809
          %814 = vst [vmem:[#allocation2 + $0x8] sm:$0xff] %v810
          %815 = vst [vmem:[#allocation2 + $0x10] sm:$0xff] %v811
          %816 = vst [vmem:[#allocation2 + $0x18] sm:$0xff] %v812
        $region44: #{tpu_custom_call.1} parent=31 // pred_fallthru
          _
        %v817 = vld [vmem:[%s209] sm:$0xff]
        %v818 = vld [vmem:[%s209 + $0x8] sm:$0xff]
        %v819 = vld [vmem:[%s209 + $0x10] sm:$0xff]
        %v820 = vld [vmem:[%s209 + $0x18] sm:$0xff]
        %v821 = vld [vmem:[%s209 + $0x20] sm:$0xff]
        %v822 = vld [vmem:[%s209 + $0x28] sm:$0xff]
        %v823 = vld [vmem:[%s209 + $0x30] sm:$0xff]
        %v824 = vld [vmem:[%s209 + $0x38] sm:$0xff]
        %v825 = vld [vmem:[%s209 + $0x40] sm:$0xff]
        %v826 = vld [vmem:[%s209 + $0x48] sm:$0xff]
        %v827 = vld [vmem:[%s209 + $0x50] sm:$0xff]
        %v828 = vld [vmem:[%s209 + $0x58] sm:$0xff]
        %v829 = vmul.f32 %v817, %v817
        %v830 = vmul.f32 %v818, %v818
        %v831 = vmul.f32 %v819, %v819
        %v832 = vmul.f32 %v820, %v820
        %v833 = vmul.f32 %v821, %v821
        %v834 = vmul.f32 %v822, %v822
        %v835 = vmul.f32 %v823, %v823
        %v836 = vmul.f32 %v824, %v824
        %v837 = vmul.f32 %v825, %v825
        %v838 = vmul.f32 %v826, %v826
        %v839 = vmul.f32 %v827, %v827
        %v840 = vmul.f32 %v828, %v828
        %vm841 = vcmask 261120
        %v842 = vsel %vm841, %v829, 0.0
        %843 = vadd.xlane.f32.xlu0 %v842
        %v844 = vpop.xlane.xlu0 %843
        %v845 = vsel %vm841, %v830, 0.0
        %846 = vadd.xlane.f32.xlu0 %v845
        %v847 = vpop.xlane.xlu0 %846
        %v848 = vsel %vm841, %v831, 0.0
        %849 = vadd.xlane.f32.xlu0 %v848
        %v850 = vpop.xlane.xlu0 %849
        %v851 = vsel %vm841, %v832, 0.0
        %852 = vadd.xlane.f32.xlu0 %v851
        %v853 = vpop.xlane.xlu0 %852
        %v854 = vsel %vm841, %v833, 0.0
        %855 = vadd.xlane.f32.xlu0 %v854
        %v856 = vpop.xlane.xlu0 %855
        %v857 = vsel %vm841, %v834, 0.0
        %858 = vadd.xlane.f32.xlu0 %v857
        %v859 = vpop.xlane.xlu0 %858
        %v860 = vsel %vm841, %v835, 0.0
        %861 = vadd.xlane.f32.xlu0 %v860
        %v862 = vpop.xlane.xlu0 %861
        %v863 = vsel %vm841, %v836, 0.0
        %864 = vadd.xlane.f32.xlu0 %v863
        %v865 = vpop.xlane.xlu0 %864
        %v866 = vsel %vm841, %v837, 0.0
        %867 = vadd.xlane.f32.xlu0 %v866
        %v868 = vpop.xlane.xlu0 %867
        %v869 = vsel %vm841, %v838, 0.0
        %870 = vadd.xlane.f32.xlu0 %v869
        %v871 = vpop.xlane.xlu0 %870
        %v872 = vsel %vm841, %v839, 0.0
        %873 = vadd.xlane.f32.xlu0 %v872
        %v874 = vpop.xlane.xlu0 %873
        %v875 = vsel %vm841, %v840, 0.0
        %876 = vadd.xlane.f32.xlu0 %v875
        %v877 = vpop.xlane.xlu0 %876
        %v878 = vmax.f32 %v844, 1e-24
        %v879 = vmax.f32 %v847, 1e-24
        %v880 = vmax.f32 %v850, 1e-24
        %v881 = vmax.f32 %v853, 1e-24
        %v882 = vmax.f32 %v856, 1e-24
        %v883 = vmax.f32 %v859, 1e-24
        %v884 = vmax.f32 %v862, 1e-24
        %v885 = vmax.f32 %v865, 1e-24
        %v886 = vmax.f32 %v868, 1e-24
        %v887 = vmax.f32 %v871, 1e-24
        %v888 = vmax.f32 %v874, 1e-24
        %v889 = vmax.f32 %v877, 1e-24
        %v890 = vrsqrt.pop %v878
        %v891 = vrsqrt.pop %v879
        %v892 = vrsqrt.pop %v880
        %v893 = vrsqrt.pop %v881
        %v894 = vrsqrt.pop %v882
        %v895 = vrsqrt.pop %v883
        %v896 = vrsqrt.pop %v884
        %v897 = vrsqrt.pop %v885
        %v898 = vrsqrt.pop %v886
        %v899 = vrsqrt.pop %v887
        %v900 = vrsqrt.pop %v888
        %v901 = vrsqrt.pop %v889
        %v902 = vmul.f32 %v817, %v890
        %v903 = vmul.f32 %v818, %v891
        %v904 = vmul.f32 %v819, %v892
        %v905 = vmul.f32 %v820, %v893
        %v906 = vmul.f32 %v821, %v894
        %v907 = vmul.f32 %v822, %v895
        %v908 = vmul.f32 %v823, %v896
        %v909 = vmul.f32 %v824, %v897
        %v910 = vmul.f32 %v825, %v898
        %v911 = vmul.f32 %v826, %v899
        %v912 = vmul.f32 %v827, %v900
        %v913 = vmul.f32 %v828, %v901
        %v914 = vsel %vm841, %v902, 0.0
        %v915 = vsel %vm841, %v903, 0.0
        %v916 = vadd.f32 %v914, %v915
        %v917 = vrot.slane %v916, 4
        %v918 = vadd.f32 %v916, %v917
        %v919 = vrot.slane %v918, 2
        %v920 = vadd.f32 %v918, %v919
        %v921 = vrot.slane %v920, 1
        %v922 = vadd.f32 %v920, %v921
        %v923 = vsel %vm841, %v904, 0.0
        %v924 = vsel %vm841, %v905, 0.0
        %v925 = vadd.f32 %v923, %v924
        %v926 = vrot.slane %v925, 4
        %v927 = vadd.f32 %v925, %v926
        %v928 = vrot.slane %v927, 2
        %v929 = vadd.f32 %v927, %v928
        %v930 = vrot.slane %v929, 1
        %v931 = vadd.f32 %v929, %v930
        %v932 = vsel %vm841, %v906, 0.0
        %v933 = vsel %vm841, %v907, 0.0
        %v934 = vadd.f32 %v932, %v933
        %v935 = vrot.slane %v934, 4
        %v936 = vadd.f32 %v934, %v935
        %v937 = vrot.slane %v936, 2
        %v938 = vadd.f32 %v936, %v937
        %v939 = vrot.slane %v938, 1
        %v940 = vadd.f32 %v938, %v939
        %v941 = vsel %vm841, %v908, 0.0
        %v942 = vsel %vm841, %v909, 0.0
        %v943 = vadd.f32 %v941, %v942
        %v944 = vrot.slane %v943, 4
        %v945 = vadd.f32 %v943, %v944
        %v946 = vrot.slane %v945, 2
        %v947 = vadd.f32 %v945, %v946
        %v948 = vrot.slane %v947, 1
        %v949 = vadd.f32 %v947, %v948
        %v950 = vsel %vm841, %v910, 0.0
        %v951 = vsel %vm841, %v911, 0.0
        %v952 = vadd.f32 %v950, %v951
        %v953 = vrot.slane %v952, 4
        %v954 = vadd.f32 %v952, %v953
        %v955 = vrot.slane %v954, 2
        %v956 = vadd.f32 %v954, %v955
        %v957 = vrot.slane %v956, 1
        %v958 = vadd.f32 %v956, %v957
        %v959 = vsel %vm841, %v912, 0.0
        %v960 = vsel %vm841, %v913, 0.0
        %v961 = vadd.f32 %v959, %v960
        %v962 = vrot.slane %v961, 4
        %v963 = vadd.f32 %v961, %v962
        %v964 = vrot.slane %v963, 2
        %v965 = vadd.f32 %v963, %v964
        %v966 = vrot.slane %v965, 1
        %v967 = vadd.f32 %v965, %v966
        %v968 = vmul.f32 %v922, %v922
        %v969 = vmul.f32 %v931, %v931
        %v970 = vmul.f32 %v940, %v940
        %v971 = vmul.f32 %v949, %v949
        %v972 = vmul.f32 %v958, %v958
        %v973 = vmul.f32 %v967, %v967
        %vm980 = vcmask 1041409
        %v981 = vsel %vm980, %v969, %v968
        %vm982 = vcmask 1042434
        %v983 = vsel %vm982, %v970, %v981
        %vm984 = vcmask 1043459
        %v985 = vsel %vm984, %v971, %v983
        %vm986 = vcmask 1044484
        %v987 = vsel %vm986, %v972, %v985
        %vm988 = vcmask 1045509
        %v989 = vsel %vm988, %v973, %v987
        %vm991 = vcmask 259072
        %v992 = vsel %vm991, %v989, 0.0
        %993 = vadd.xlane.f32.xlu0 %v992
        %v994 = vpop.xlane.xlu0 %993
        %v995 = vmax.f32 %v994, 1e-24
        %v996 = vrsqrt.pop %v995
        %v998 = vrot.slane %v996, 1
        %v999 = vrot.slane %v996, 2
        %v1000 = vrot.slane %v996, 3
        %v1001 = vrot.slane %v996, 4
        %v1002 = vrot.slane %v996, 5
        %v1009 = vmul.f32 %v922, %v996
        %v1010 = vmul.f32 %v931, %v998
        %v1011 = vmul.f32 %v940, %v999
        %v1012 = vmul.f32 %v949, %v1000
        %v1013 = vmul.f32 %v958, %v1001
        %v1014 = vmul.f32 %v967, %v1002
        %v1015 = vld [vmem:[#allocation2] sm:$0xff]
        %v1016 = vld [vmem:[#allocation2 + $0x8] sm:$0xff]
        %v1017 = vld [vmem:[#allocation2 + $0x10] sm:$0xff]
        %v1018 = vld [vmem:[#allocation2 + $0x18] sm:$0xff]
        %v1025 = vrot.slane %v1010, 7
        %v1026 = vsel %vm980, %v1025, %v1009
        %v1027 = vrot.slane %v1011, 6
        %v1028 = vsel %vm982, %v1027, %v1026
        %v1029 = vrot.slane %v1012, 5
        %v1030 = vsel %vm984, %v1029, %v1028
        %v1031 = vrot.slane %v1013, 4
        %v1032 = vsel %vm986, %v1031, %v1030
        %v1033 = vrot.slane %v1014, 3
        %v1034 = vsel %vm988, %v1033, %v1032
        %v1035 = vsel %vm841, %v1034, 0
        %1037 = vmatprep.subr.mxu0 0.0
        %1038 = vmatpush1.msra.mxu0 %v1015
        %1039 = vmatprep.subr.mxu0 0.0
        %1040 = vmatpush1.msra.mxu0 %v1016
        %1041 = vmatprep.subr.mxu0 0.0
        %1042 = vmatpush1.msra.mxu0 %v1017
        %1043 = vmatprep.subr.mxu0 0.0
        %1044 = vmatpush1.msra.mxu0 %v1018
        %1045 = vmatprep.subr.mxu0 0.0
        %1046 = vmatpush1.msra.mxu0 0.0
        %1047 = vmatprep.subr.mxu0 0.0
        %1048 = vmatpush1.msra.mxu0 0.0
        %1049 = vmatprep.subr.mxu0 0.0
        %1050 = vmatpush1.msra.mxu0 0.0
        %1051 = vmatprep.subr.mxu0 0.0
        %1052 = vmatpush1.msra.mxu0 0.0
        %1053 = vmatprep.subr.mxu0 0.0
        %1054 = vmatpush1.msra.mxu0 0.0
        %1055 = vmatprep.subr.mxu0 0.0
        %1056 = vmatpush1.msra.mxu0 0.0
        %1057 = vmatprep.subr.mxu0 0.0
        %1058 = vmatpush1.msra.mxu0 0.0
        %1059 = vmatprep.subr.mxu0 0.0
        %1060 = vmatpush1.msra.mxu0 0.0
        %1061 = vmatprep.subr.mxu0 0.0
        %1062 = vmatpush1.msra.mxu0 0.0
        %1063 = vmatprep.subr.mxu0 0.0
        %1064 = vmatpush1.msra.mxu0 0.0
        %1065 = vmatprep.subr.mxu0 0.0
        %1066 = vmatpush1.msra.mxu0 0.0
        %1067 = vmatprep.subr.mxu0 0.0
        %1068 = vmatpush1.msra.mxu0 0.0
        %1069 = vmatprep.subr.mxu0 0.0
        %1070 = vmatpush1.msra.mxu0 0.0
        %1071 = vmatprep.subr.mxu0 0.0
        %1072 = vmatpush1.msra.mxu0 0.0
        %1073 = vmatprep.subr.mxu0 0.0
        %1074 = vmatpush1.msra.mxu0 0.0
        %1075 = vmatprep.subr.mxu0 0.0
        %1076 = vmatpush1.msra.mxu0 0.0
        %1077 = vmatprep.subr.mxu0 0.0
        %1078 = vmatpush1.msra.mxu0 0.0
        %1079 = vmatprep.subr.mxu0 0.0
        %1080 = vmatpush1.msra.mxu0 0.0
        %1081 = vmatprep.subr.mxu0 0.0
        %1082 = vmatpush1.msra.mxu0 0.0
        %1083 = vmatprep.subr.mxu0 0.0
        %1084 = vmatpush1.msra.mxu0 0.0
        %1085 = vmatprep.subr.mxu0 0.0
        %1086 = vmatpush1.msra.mxu0 0.0
        %1087 = vmatprep.subr.mxu0 0.0
        %1088 = vmatpush1.msra.mxu0 0.0
        %1089 = vmatprep.subr.mxu0 0.0
        %1090 = vmatpush1.msra.mxu0 0.0
        %1091 = vmatprep.subr.mxu0 0.0
        %1092 = vmatpush1.msra.mxu0 0.0
        %1093 = vmatprep.subr.mxu0 0.0
        %1094 = vmatpush1.msra.mxu0 0.0
        %1095 = vmatprep.subr.mxu0 0.0
        %1096 = vmatpush1.msra.mxu0 0.0
        %1097 = vmatprep.subr.mxu0 0.0
        %1098 = vmatpush1.msra.mxu0 0.0
        %1099 = vmatprep.subr.mxu0 0.0
        %1100 = vmatpush1.msra.mxu0 0.0
        %1101 = vmatprep.mubr.f32.mxu0 0.0
        %1102 = vmatmul.mubr.f32.gmra.mrb[0].mxu0 %v1035
        %v1103 = vpop.f32.mrb[0].mxu0
        %v1104 = vadd.f32 0.0, %v1103
        %v1105 = vpop.f32.mrb[0].mxu0
        %1106 = vdwg.mxu0
        %s1107 = sld [smem:[#allocation3]]
        %v1108 = vstv %s1107
        %v1109 = vmul.f32 %v1108, %v1104
        %1110 = vst [vmem:[%s255] sm:$0x3f] %v1109
        %p1111 = scmp.lt.s32.totalorder %s25, 1
        %s1112 = scalar_select %p1111, %s25, 1
        %p1113 = scmp.lt.s32.totalorder %s26, 0
        %s1114 = scalar_select %p1113, %s26, 0
        %s1115 = sadd.s32 %s1114, %s1112
        %s1116 = smul.addr %s1115, 8
        %s1117 = scalar_lea.vmem %s3, %s1116
        // Predicated region
        $region45: #{tpu_custom_call.1} parent=31 // pred_check
          %p1118 = pneg %p128
        $region46: #{tpu_custom_call.1} parent=31 // pred_check_branch
          %1120 = sbr.rel (%p1118) target = $region48
        $region47: #{tpu_custom_call.1} parent=31 // pred_region
          _
        $region48: #{tpu_custom_call.1} parent=31 // pred_fallthru
          _
      $region32: #{tpu_custom_call.1} parent=5 // pred_fallthru
        _
      %p1121 = scmp.le.s32.totalorder 2, %s16
      // Predicated region
      $region49: #{tpu_custom_call.1} parent=5 // pred_check
        %p1122 = pneg %p1121
      $region50: #{tpu_custom_call.1} parent=5 // pred_check_branch
        %1124 = sbr.rel (%p1122) target = $region52
      $region51: #{tpu_custom_call.1} parent=5 // pred_region
        %s1125 = ssub.s32 %s16, 2
        // Predicated region
        $region53: #{tpu_custom_call.1} parent=51 // pred_check
          %p1126 = pneg %p134
        $region54: #{tpu_custom_call.1} parent=51 // pred_check_branch
          %1128 = sbr.rel (%p1126) target = $region56
        $region55: #{tpu_custom_call.1} parent=51 // pred_region
          %p1129 = scmp.lt.s32.totalorder %s27, 1
          %s1130 = scalar_select %p1129, %s27, 1
          %p1131 = scmp.lt.s32.totalorder %s28, 0
          %s1132 = scalar_select %p1131, %s28, 0
          %s1133 = sadd.s32 %s1132, %s1130
          %s1134 = smul.addr %s1133, 8
          %s1135 = scalar_lea.vmem %s3, %s1134
        $region56: #{tpu_custom_call.1} parent=51 // pred_fallthru
          _
      $region52: #{tpu_custom_call.1} parent=5 // pred_fallthru
        _
    $region6: #{tpu_custom_call.1} parent=1 // loop_footer
      %s20 = sadd.s32 1, %s16
    $region7: #{tpu_custom_call.1} parent=1 // loop_footer_branch
      %15 = sbr.rel target = $region3
    $region8: #{tpu_custom_call.1} parent=1 // loop_exit
      _
    %1136 = vsyncpa [#allocation5], 1
    %s1137 = scalar_lea.sflag [#allocation5], 1
    %1138 = vsyncpa %s1137, 1
    %1139 = vsyncpa [#allocation7], 1
    %s1140 = scalar_lea.sflag [#allocation7], 1
    %1141 = vsyncpa %s1140, 1

</llo_original>
